<compile_context>
chip_gen: v7x
topology: tpu7x:2x2x1
jax: 0.10.0
libtpu: 0.0.40
codegen_flags: <defaults>
</compile_context>

<pallas_src>
import functools
import math

import jax
import jax.numpy as jnp
from jax import lax
from jax.experimental import pallas as pl
from jax.experimental.pallas import tpu as pltpu


# ----------------------------------------------------------------------------
# Small helpers
# ----------------------------------------------------------------------------

_TM, _TN, _TK = 1024, 1024, 2048            # GEMM tile caps (bf16 operands, fp32 acc)
_VMEM_LIMIT = 64 * 1024 * 1024              # <= physical VMEM on every generation


def _ceil_to(x, m):
    return ((x + m - 1) // m) * m


def _pad2(x, rows, cols):
    r, c = x.shape
    if r == rows and c == cols:
        return x
    return jnp.pad(x, ((0, rows - r), (0, cols - c)))


def _pad1(x, n):
    if x.shape[0] == n:
        return x
    return jnp.pad(x, (0, n - x.shape[0]))


def _head_group(H, dh):
    """Smallest divisor G of H with G*dh a multiple of 128 lanes (else all heads)."""
    for G in range(1, H + 1):
        if H % G == 0 and (G * dh) % 128 == 0:
            return G
    return H


# ----------------------------------------------------------------------------
# Capability probes (cached) -> correctness with graceful fallbacks
# ----------------------------------------------------------------------------

_ERF_OK = None
_SHIFT_MODE = {}


def _erf_in_kernel_supported():
    global _ERF_OK
    if _ERF_OK is None:
        def k(x_ref, o_ref):
            o_ref[...] = lax.erf(x_ref[...])
        try:
            jax.block_until_ready(
                pl.pallas_call(k, out_shape=jax.ShapeDtypeStruct((8, 128), jnp.float32))(
                    jnp.zeros((8, 128), jnp.float32)))
            _ERF_OK = True
        except Exception:
            _ERF_OK = False
    return _ERF_OK


def _rel_shift(bd_full, S, mode):
    """HF XLNet rel_shift: out[i, j] = bd_full[i, S - i + j], 0 <= j < S."""
    if mode == "roll_p":
        return pltpu.roll(bd_full, shift=S, axis=1, stride=1, stride_axis=0)[:, :S]
    if mode == "roll_n":
        return pltpu.roll(bd_full, shift=S, axis=1, stride=-1, stride_axis=0)[:, :S]
    if mode == "reshape":
        k2 = bd_full.shape[1]
        x = bd_full.reshape(k2, S)[1:, :]
        return x.reshape(S, k2 - 1)[:, :S]
    # last-resort (slow, but always lowers): per-row static slices
    rows = [bd_full[i:i + 1, S - i:2 * S - i] for i in range(S)]
    return jnp.concatenate(rows, axis=0)


def _rel_shift_ref(x):
    S, k2 = x.shape
    return x.reshape(k2, S)[1:, :].reshape(S, k2 - 1)[:, :S]


def _pick_shift_mode(S):
    """Numerically validate the fastest available rel_shift lowering for this S."""
    if S in _SHIFT_MODE:
        return _SHIFT_MODE[S]
    x = jnp.arange(S * 2 * S, dtype=jnp.float32).reshape(S, 2 * S)
    want = jax.block_until_ready(_rel_shift_ref(x))
    mode_found = "slices"
    for mode in ("roll_p", "roll_n", "reshape"):
        def k(x_ref, o_ref, _mode=mode):
            o_ref[...] = _rel_shift(x_ref[...], S, _mode)
        try:
            got = pl.pallas_call(
                k, out_shape=jax.ShapeDtypeStruct((S, S), jnp.float32))(x)
            if bool(jnp.all(jax.block_until_ready(got) == want)):
                mode_found = mode
                break
        except Exception:
            continue
    _SHIFT_MODE[S] = mode_found
    return mode_found


# ----------------------------------------------------------------------------
# Pallas kernels
# ----------------------------------------------------------------------------

def _gemm_accumulate(x_ref, w_ref, acc_ref):
    @pl.when(pl.program_id(2) == 0)
    def _init():
        acc_ref[...] = jnp.zeros_like(acc_ref)
    acc_ref[...] += jnp.dot(x_ref[...], w_ref[...], preferred_element_type=jnp.float32)


def _dense_kernel(x_ref, w_ref, b_ref, o_ref, acc_ref, *, activation):
    """Tiled GEMM, fp32 accumulation; bias (+ optional exact erf-GELU) epilogue."""
    _gemm_accumulate(x_ref, w_ref, acc_ref)

    @pl.when(pl.program_id(2) == pl.num_programs(2) - 1)
    def _finalize():
        y = acc_ref[...] + b_ref[...]
        if activation == "gelu":
            y = 0.5 * y * (1.0 + lax.erf(y * (1.0 / math.sqrt(2.0))))
        o_ref[...] = y.astype(o_ref.dtype)


def _dense_res_ln_kernel(x_ref, w_ref, b_ref, res_ref, g_ref, beta_ref, o_ref, acc_ref,
                         *, eps):
    """Tiled GEMM with fused residual-add + LayerNorm epilogue (needs tn == full N)."""
    _gemm_accumulate(x_ref, w_ref, acc_ref)

    @pl.when(pl.program_id(2) == pl.num_programs(2) - 1)
    def _finalize():
        z = acc_ref[...] + b_ref[...] + res_ref[...].astype(jnp.float32)
        mu = jnp.mean(z, axis=-1, keepdims=True)
        var = jnp.mean(jnp.square(z - mu), axis=-1, keepdims=True)
        zn = (z - mu) * lax.rsqrt(var + eps)
        o_ref[...] = (zn * g_ref[...] + beta_ref[...]).astype(o_ref.dtype)


def _attn_kernel(q_ref, k_ref, v_ref, kr_ref, rw_ref, rr_ref, mask_ref, o_ref,
                 *, scale, heads, dh, shift_mode):
    """XLNet relative attention for one (batch, head-group) grid step.

    q/k/v_ref : (1, S, heads*dh) bf16     kr_ref : (2S, heads*dh) bf16
    rw/rr_ref : (1, heads*dh)    fp32     mask_ref: (1, 1, S) fp32 additive key mask
    o_ref     : (1, S, heads*dh) bf16     (lane-dense output slab)
    """
    S = q_ref.shape[1]

    neg = mask_ref[0]                                             # (1, S)
    row = lax.broadcasted_iota(jnp.int32, (S, S), 0)
    col = lax.broadcasted_iota(jnp.int32, (S, S), 1)
    add_mask = jnp.where(row == col, 0.0, neg)                    # diagonal never masked

    outs = []
    for g in range(heads):
        sl = slice(g * dh, (g + 1) * dh)
        q = q_ref[0, :, sl].astype(jnp.float32)                   # (S, dh)
        k = k_ref[0, :, sl]                                       # (S, dh)  bf16
        v = v_ref[0, :, sl]                                       # (S, dh)  bf16
        kr = kr_ref[:, sl]                                        # (2S, dh) bf16

        qw = (q + rw_ref[:, sl]).astype(k.dtype)
        qr = (q + rr_ref[:, sl]).astype(kr.dtype)

        ac = lax.dot_general(qw, k, (((1,), (1,)), ((), ())),
                             preferred_element_type=jnp.float32)          # (S, S)
        bd_full = lax.dot_general(qr, kr, (((1,), (1,)), ((), ())),
                                  preferred_element_type=jnp.float32)     # (S, 2S)
        bd = _rel_shift(bd_full, S, shift_mode)                           # (S, S)

        score = (ac + bd) * scale + add_mask
        score = score - jnp.max(score, axis=-1, keepdims=True)
        p = jnp.exp(score)
        p = p / jnp.sum(p, axis=-1, keepdims=True)                # exact (HF parity)

        outs.append(jnp.dot(p.astype(v.dtype), v, preferred_element_type=jnp.float32))

    out = outs[0] if len(outs) == 1 else jnp.concatenate(outs, axis=-1)
    o_ref[0] = out.astype(o_ref.dtype)


def _add_ln_kernel(x_ref, y_ref, g_ref, b_ref, o_ref, *, eps):
    z = x_ref[...].astype(jnp.float32) + y_ref[...].astype(jnp.float32)
    mu = jnp.mean(z, axis=-1, keepdims=True)
    var = jnp.mean(jnp.square(z - mu), axis=-1, keepdims=True)
    zn = (z - mu) * lax.rsqrt(var + eps)
    o_ref[...] = (zn * g_ref[...] + b_ref[...]).astype(o_ref.dtype)


# ----------------------------------------------------------------------------
# Kernel wrappers
# ----------------------------------------------------------------------------

def add_layer_norm(x, y, gamma, beta, eps):
    """Standalone LayerNorm(x + y) fallback (only used when d_model > _TN)."""
    M, D = x.shape
    tm = M if M <= 1024 else 1024
    Mp = _ceil_to(M, tm)
    xp = _pad2(x.astype(jnp.bfloat16), Mp, D)
    yp = _pad2(y.astype(jnp.bfloat16), Mp, D)
    out = pl.pallas_call(
        functools.partial(_add_ln_kernel, eps=eps),
        out_shape=jax.ShapeDtypeStruct((Mp, D), jnp.bfloat16),
        grid=(Mp // tm,),
        in_specs=[pl.BlockSpec((tm, D), lambda i: (i, 0)),
                  pl.BlockSpec((tm, D), lambda i: (i, 0)),
                  pl.BlockSpec((1, D), lambda i: (0, 0)),
                  pl.BlockSpec((1, D), lambda i: (0, 0))],
        out_specs=pl.BlockSpec((tm, D), lambda i: (i, 0)),
        compiler_params=pltpu.CompilerParams(
            dimension_semantics=("parallel",), vmem_limit_bytes=_VMEM_LIMIT),
    )(xp, yp, gamma.reshape(1, D).astype(jnp.float32),
      beta.reshape(1, D).astype(jnp.float32))
    return out[:M] if Mp != M else out


def dense(x, w, b=None, activation=None, residual=None, ln=None,
          out_dtype=jnp.bfloat16):
    """Tiled pipelined GEMM y = x @ w + b, bf16 operands / fp32 accumulation.

    Optional fused epilogues: exact erf-GELU (activation="gelu"), or residual-add +
    LayerNorm (residual=..., ln=(gamma, beta, eps)) when the N dim fits one tile.
    """
    x = x.astype(jnp.bfloat16)
    w = w.astype(jnp.bfloat16)
    M, K = x.shape
    K2, N = w.shape
    assert K == K2
    bias = jnp.zeros((N,), jnp.float32) if b is None else b.astype(jnp.float32)

    fuse_ln = (residual is not None) and (ln is not None) and (N <= _TN) \
        and (activation is None)

    act = activation
    gelu_fallback = False
    if activation == "gelu" and not _erf_in_kernel_supported():
        act = None
        gelu_fallback = True

    tm = M if M <= _TM else _TM
    tn = N if N <= _TN else _TN
    tk = K if K <= _TK else _TK
    Mp, Np, Kp = _ceil_to(M, tm), _ceil_to(N, tn), _ceil_to(K, tk)

    xp = _pad2(x, Mp, Kp)
    wp = _pad2(w, Kp, Np)
    bp = _pad1(bias, Np).reshape(1, Np)

    grid = (Mp // tm, Np // tn, Kp // tk)
    in_specs = [pl.BlockSpec((tm, tk), lambda i, j, k: (i, k)),
                pl.BlockSpec((tk, tn), lambda i, j, k: (k, j)),
                pl.BlockSpec((1, tn), lambda i, j, k: (0, j))]
    out_spec = pl.BlockSpec((tm, tn), lambda i, j, k: (i, j))
    cp = pltpu.CompilerParams(
        dimension_semantics=("parallel", "parallel", "arbitrary"),
        vmem_limit_bytes=_VMEM_LIMIT)
    scratch = [pltpu.VMEM((tm, tn), jnp.float32)]

    if fuse_ln:
        gamma, beta, eps = ln
        res = _pad2(residual.astype(jnp.bfloat16), Mp, Np)
        out = pl.pallas_call(
            functools.partial(_dense_res_ln_kernel, eps=eps),
            out_shape=jax.ShapeDtypeStruct((Mp, Np), out_dtype),
            grid=grid,
            in_specs=in_specs + [
                pl.BlockSpec((tm, tn), lambda i, j, k: (i, j)),
                pl.BlockSpec((1, tn), lambda i, j, k: (0, j)),
                pl.BlockSpec((1, tn), lambda i, j, k: (0, j))],
            out_specs=out_spec,
            scratch_shapes=scratch,
            compiler_params=cp,
        )(xp, wp, bp, res, gamma.reshape(1, N).astype(jnp.float32),
          beta.reshape(1, N).astype(jnp.float32))
        return out[:M, :N] if (Mp, Np) != (M, N) else out

    kernel_out_dtype = jnp.float32 if gelu_fallback else out_dtype
    out = pl.pallas_call(
        functools.partial(_dense_kernel, activation=act),
        out_shape=jax.ShapeDtypeStruct((Mp, Np), kernel_out_dtype),
        grid=grid,
        in_specs=in_specs,
        out_specs=out_spec,
        scratch_shapes=scratch,
        compiler_params=cp,
    )(xp, wp, bp)

    if gelu_fallback:
        out = jax.nn.gelu(out, approximate=False).astype(out_dtype)
    if (Mp, Np) != (M, N):
        out = out[:M, :N]
    if residual is not None and ln is not None and not fuse_ln:
        gamma, beta, eps = ln
        out = add_layer_norm(out, residual, gamma, beta, eps)
    return out


def attention(qkv, kr, r_w_bias, r_r_bias, neg_mask, scale, H, dh):
    """Fused XLNet relative attention.

    qkv : (B, S, 3*D) bf16 (q|k|v, per-head contiguous columns)   kr: (2S, D) bf16
    r_w_bias / r_r_bias : (H, dh) fp32    neg_mask : (B, 1, S) fp32 additive key mask
    returns (B, S, D) bf16.
    """
    B, S, threeD = qkv.shape
    D = H * dh
    assert threeD == 3 * D
    G = _head_group(H, dh)          # heads processed per grid step
    nb = H // G                     # head groups
    wq = G * dh                     # lane width per group
    shift_mode = _pick_shift_mode(S)

    qkv = qkv.astype(jnp.bfloat16)
    kr = kr.astype(jnp.bfloat16)
    rw = r_w_bias.reshape(1, D).astype(jnp.float32)
    rr = r_r_bias.reshape(1, D).astype(jnp.float32)
    mask = neg_mask.astype(jnp.float32)

    kernel = functools.partial(_attn_kernel, scale=scale, heads=G, dh=dh,
                               shift_mode=shift_mode)
    out_spec = pl.BlockSpec((1, S, wq), lambda b, g: (b, 0, g))
    cp = pltpu.CompilerParams(dimension_semantics=("parallel", "parallel"),
                              vmem_limit_bytes=_VMEM_LIMIT)

    if wq % 128 == 0:
        # Index the fused qkv array in place (same array, three lane-block offsets).
        in_specs = [
            pl.BlockSpec((1, S, wq), lambda b, g: (b, 0, g)),
            pl.BlockSpec((1, S, wq), lambda b, g: (b, 0, nb + g)),
            pl.BlockSpec((1, S, wq), lambda b, g: (b, 0, 2 * nb + g)),
            pl.BlockSpec((2 * S, wq), lambda b, g: (0, g)),
            pl.BlockSpec((1, wq), lambda b, g: (0, g)),
            pl.BlockSpec((1, wq), lambda b, g: (0, g)),
            pl.BlockSpec((1, 1, S), lambda b, g: (b, 0, 0)),
        ]
        args = (qkv, qkv, qkv, kr, rw, rr, mask)
    else:
        # Tiny / irregular head dims: split q/k/v so blocks equal full array dims.
        q = qkv[:, :, :D]
        k = qkv[:, :, D:2 * D]
        v = qkv[:, :, 2 * D:]
        in_specs = [
            pl.BlockSpec((1, S, D), lambda b, g: (b, 0, 0)),
            pl.BlockSpec((1, S, D), lambda b, g: (b, 0, 0)),
            pl.BlockSpec((1, S, D), lambda b, g: (b, 0, 0)),
            pl.BlockSpec((2 * S, D), lambda b, g: (0, 0)),
            pl.BlockSpec((1, D), lambda b, g: (0, 0)),
            pl.BlockSpec((1, D), lambda b, g: (0, 0)),
            pl.BlockSpec((1, 1, S), lambda b, g: (b, 0, 0)),
        ]
        args = (q, k, v, kr, rw, rr, mask)

    return pl.pallas_call(
        kernel,
        out_shape=jax.ShapeDtypeStruct((B, S, D), jnp.bfloat16),
        grid=(B, nb),
        in_specs=in_specs,
        out_specs=out_spec,
        compiler_params=cp,
    )(*args)


# ----------------------------------------------------------------------------
# Pure-JAX glue (indexing only)
# ----------------------------------------------------------------------------

def relative_positional_encoding(S, D):
    """HF XLNetModel.relative_positional_encoding: attn_type='bi', mems=None, clamp_len<0."""
    freq_seq = jnp.arange(0, D, 2, dtype=jnp.float32)
    inv_freq = 1.0 / (10000.0 ** (freq_seq / D))
    pos_seq = jnp.arange(S, -S, -1.0, dtype=jnp.float32)              # (2S,)
    sinusoid = jnp.einsum("i,d->id", pos_seq, inv_freq)               # (2S, D/2)
    return jnp.concatenate([jnp.sin(sinusoid), jnp.cos(sinusoid)], axis=-1)   # (2S, D)


# ----------------------------------------------------------------------------
# Parameters (deterministic synthetic init, XLNet-style std=0.02 normals)
# ----------------------------------------------------------------------------

def make_params(key, V, D, H, L, Di):
    dh = D // H
    std = 0.02

    def nrm(k, shape, dtype=jnp.bfloat16):
        return (std * jax.random.normal(k, shape, jnp.float32)).astype(dtype)

    keys = jax.random.split(key, L + 1)
    word_emb = nrm(keys[0], (V, D))
    params = {
        "word_emb": word_emb,                       # (V, D) embedding table
        "lm_w": jnp.transpose(word_emb),            # tied LM head, pre-transposed (D, V)
        "lm_bias": jnp.zeros((V,), jnp.float32),
        "layers": [],
    }
    for l in range(L):
        ks = jax.random.split(keys[l + 1], 7)
        params["layers"].append({
            "qkv": nrm(ks[0], (D, 3 * D)),          # fused q|k|v projection
            "r":   nrm(ks[1], (D, D)),              # relative-position projection
            "o_t": nrm(ks[2], (D, D)),              # o-projection, pre-transposed (H*dh, D)
            "r_w_bias": nrm(ks[3], (H, dh), jnp.float32),
            "r_r_bias": nrm(ks[4], (H, dh), jnp.float32),
            "ln_attn_g": jnp.ones((D,), jnp.float32),
            "ln_attn_b": jnp.zeros((D,), jnp.float32),
            "ff_w1": nrm(ks[5], (D, Di)),
            "ff_b1": jnp.zeros((Di,), jnp.float32),
            "ff_w2": nrm(ks[6], (Di, D)),
            "ff_b2": jnp.zeros((D,), jnp.float32),
            "ln_ff_g": jnp.ones((D,), jnp.float32),
            "ln_ff_b": jnp.zeros((D,), jnp.float32),
        })
    return params


# ----------------------------------------------------------------------------
# Forward pass == XLNetLMHeadModel(input_ids, attention_mask)[0]  (inference)
# ----------------------------------------------------------------------------

def xlnet_forward(params, input_ids, attention_mask, num_heads):
    B, S = input_ids.shape
    word_emb = params["word_emb"]
    V, D = word_emb.shape
    H = num_heads
    dh = D // H
    scale = 1.0 / math.sqrt(dh)
    ln_eps = 1e-12

    h_flat = jnp.take(word_emb, input_ids, axis=0).reshape(B * S, D).astype(jnp.bfloat16)
    pos_emb = relative_positional_encoding(S, D).astype(jnp.bfloat16)   # (2S, D)

    # XLNet h-stream mask: key j masked if padding, unless j == i (diag rebuilt in-kernel).
    input_mask = 1.0 - attention_mask.astype(jnp.float32)               # (B, S)
    neg_mask = (-1e30 * input_mask).reshape(B, 1, S)

    for layer in params["layers"]:
        # fused q/k/v projection (single read of the hidden state) + r projection
        qkv = dense(h_flat, layer["qkv"]).reshape(B, S, 3 * D)
        kr = dense(pos_emb, layer["r"])                                  # (2S, D)

        # fused relative-attention core (scores, rel_shift, mask, softmax, prob@V)
        attn = attention(qkv, kr, layer["r_w_bias"], layer["r_r_bias"],
                         neg_mask, scale, H, dh)                         # (B, S, D)
        attn_flat = attn.reshape(B * S, D)

        # o-projection GEMM with fused residual-add + LayerNorm epilogue
        h_flat = dense(attn_flat, layer["o_t"], residual=h_flat,
                       ln=(layer["ln_attn_g"], layer["ln_attn_b"], ln_eps))

        # position-wise FFN: GELU GEMM, then GEMM with fused residual + LayerNorm
        ff1 = dense(h_flat, layer["ff_w1"], layer["ff_b1"], activation="gelu")
        h_flat = dense(ff1, layer["ff_w2"], layer["ff_b2"], residual=h_flat,
                       ln=(layer["ln_ff_g"], layer["ln_ff_b"], ln_eps))

    # LM head tied to the word embedding (weight pre-transposed to (D, V)).
    # fp32 logits kept for parity with the PyTorch reference output dtype.
    logits = dense(h_flat, params["lm_w"], params["lm_bias"], out_dtype=jnp.float32)
    return logits.reshape(B, S, V)


# ----------------------------------------------------------------------------
# Demo
# ----------------------------------------------------------------------------

if __name__ == "__main__":
    # small config consistent with MyXL / XLNetConfig structure
    B, S = 2, 8
    D, H, L, V, Di = 32, 4, 2, 128, 64     # hidden, heads, layers, vocab, d_inner

    key = jax.random.PRNGKey(0)
    pkey, ikey = jax.random.split(key)
    params = make_params(pkey, V, D, H, L, Di)

    input_ids = jax.random.randint(ikey, (B, S), 0, V, dtype=jnp.int32)
    attention_mask = jnp.ones((B, S), jnp.float32).at[1, 5:].set(0.0)   # exercise padding

    logits = xlnet_forward(params, input_ids, attention_mask, H)
    logits = jax.block_until_ready(logits)

    assert logits.shape == (B, S, V), logits.shape
    assert bool(jnp.all(jnp.isfinite(logits)))
    print("KERNEL_OK")
</pallas_src>

<mosaic_0001>
module attributes {stable_mosaic.version = 11 : i64} {
  func.func @_dense_kernel(%arg0: i32, %arg1: i32, %arg2: i32, %arg3: memref<16x32xbf16, #tpu.memory_space<vmem>>, %arg4: memref<32x96xbf16, #tpu.memory_space<vmem>>, %arg5: memref<1x96xf32, #tpu.memory_space<vmem>>, %arg6: memref<16x96xbf16, #tpu.memory_space<vmem>>, %arg7: memref<16x96xf32, #tpu.memory_space<vmem>>) attributes {dimension_semantics = [#tpu.dimension_semantics<parallel>, #tpu.dimension_semantics<parallel>, #tpu.dimension_semantics<arbitrary>], iteration_bounds = array<i64: 1, 1, 1>, scalar_prefetch = 0 : i64, scratch_operands = 1 : i64, tpu.core_type = #tpu.core_type<tc>, window_params = [{transform_indices = @transform_0, window_bounds = array<i64: 16, 32>}, {transform_indices = @transform_1, window_bounds = array<i64: 32, 96>}, {transform_indices = @transform_2, window_bounds = array<i64: 1, 96>}, {transform_indices = @transform_3, window_bounds = array<i64: 16, 96>}]} {
    %c0_i32 = arith.constant 0 : i32
    %0 = arith.cmpi eq, %arg2, %c0_i32 : i32
    %1 = arith.extui %0 : i1 to i32
    %c0_i32_0 = arith.constant 0 : i32
    %2 = arith.cmpi ne, %1, %c0_i32_0 : i32
    scf.if %2 {
      %cst_10 = arith.constant 0.000000e+00 : f32
      %12 = vector.broadcast %cst_10 : f32 to vector<16x96xf32>
      %c0_11 = arith.constant 0 : index
      %c0_12 = arith.constant 0 : index
      %13 = vector.load %arg7[%c0_11, %c0_12] : memref<16x96xf32, #tpu.memory_space<vmem>>, vector<16x96xf32>
      tpu.vector_store %arg7[%c0_11, %c0_12], %12 {strides = array<i32>} : memref<16x96xf32, #tpu.memory_space<vmem>>, vector<16x96xf32>,
    } else {
    }
    %c0 = arith.constant 0 : index
    %c0_1 = arith.constant 0 : index
    %3 = vector.load %arg7[%c0, %c0_1] : memref<16x96xf32, #tpu.memory_space<vmem>>, vector<16x96xf32>
    %c0_2 = arith.constant 0 : index
    %c0_3 = arith.constant 0 : index
    %4 = vector.load %arg3[%c0_2, %c0_3] : memref<16x32xbf16, #tpu.memory_space<vmem>>, vector<16x32xbf16>
    %c0_4 = arith.constant 0 : index
    %c0_5 = arith.constant 0 : index
    %5 = vector.load %arg4[%c0_4, %c0_5] : memref<32x96xbf16, #tpu.memory_space<vmem>>, vector<32x96xbf16>
    %cst = arith.constant dense<0.000000e+00> : vector<16x96xf32>
    %6 = tpu.matmul %4, %5, %cst {dimension_numbers = #tpu.dot_dimension_numbers<[1], [0], [0], [1], [0, 0, 1, 1], [], []>} : vector<16x32xbf16>, vector<32x96xbf16>, vector<16x96xf32> -> vector<16x96xf32>
    %7 = arith.addf %3, %6 : vector<16x96xf32>
    %c0_6 = arith.constant 0 : index
    %c0_7 = arith.constant 0 : index
    %8 = vector.load %arg7[%c0_6, %c0_7] : memref<16x96xf32, #tpu.memory_space<vmem>>, vector<16x96xf32>
    tpu.vector_store %arg7[%c0_6, %c0_7], %7 {strides = array<i32>} : memref<16x96xf32, #tpu.memory_space<vmem>>, vector<16x96xf32>,
    %c0_i32_8 = arith.constant 0 : i32
    %9 = arith.cmpi eq, %arg2, %c0_i32_8 : i32
    %10 = arith.extui %9 : i1 to i32
    %c0_i32_9 = arith.constant 0 : i32
    %11 = arith.cmpi ne, %10, %c0_i32_9 : i32
    scf.if %11 {
      %c0_10 = arith.constant 0 : index
      %c0_11 = arith.constant 0 : index
      %12 = vector.load %arg7[%c0_10, %c0_11] : memref<16x96xf32, #tpu.memory_space<vmem>>, vector<16x96xf32>
      %c0_12 = arith.constant 0 : index
      %c0_13 = arith.constant 0 : index
      %13 = vector.load %arg5[%c0_12, %c0_13] : memref<1x96xf32, #tpu.memory_space<vmem>>, vector<1x96xf32>
      %14 = vector.broadcast %13 : vector<1x96xf32> to vector<16x96xf32>
      %15 = arith.addf %12, %14 : vector<16x96xf32>
      %16 = arith.truncf %15 : vector<16x96xf32> to vector<16x96xbf16>
      %c0_14 = arith.constant 0 : index
      %c0_15 = arith.constant 0 : index
      %17 = vector.load %arg6[%c0_14, %c0_15] : memref<16x96xbf16, #tpu.memory_space<vmem>>, vector<16x96xbf16>
      tpu.vector_store %arg6[%c0_14, %c0_15], %16 {strides = array<i32>} : memref<16x96xbf16, #tpu.memory_space<vmem>>, vector<16x96xbf16>,
    } else {
    }
    return
  }
  func.func @transform_0(%arg0: i32, %arg1: i32, %arg2: i32) -> (i32, i32) {
    %c0_i32 = arith.constant 0 : i32
    return %arg0, %arg2 : i32, i32
  }
  func.func @transform_1(%arg0: i32, %arg1: i32, %arg2: i32) -> (i32, i32) {
    %c0_i32 = arith.constant 0 : i32
    return %arg2, %arg1 : i32, i32
  }
  func.func @transform_2(%arg0: i32, %arg1: i32, %arg2: i32) -> (i32, i32) {
    %c0_i32 = arith.constant 0 : i32
    %c0_i32_0 = arith.constant 0 : i32
    return %c0_i32, %arg1 : i32, i32
  }
  func.func @transform_3(%arg0: i32, %arg1: i32, %arg2: i32) -> (i32, i32) {
    %c0_i32 = arith.constant 0 : i32
    return %arg0, %arg1 : i32, i32
  }
}

</mosaic_0001>

<llo_original>
// kernel: tpu_custom_call.1
$region0: #{tpu_custom_call.1}
  #allocation0 [shape = 'u32[]', space=smem, size = 0x4, offset = 0x4, fixed_abs, tag = 'smem constant byte address 0x4 - core index']
  #allocation1 [shape = 'u32[144,128]{1,0:T(1,128)}', space=vmem, size = 0x12000, scoped, tag = 'internal scratch']
  #allocation2 [shape = 'f32[16,96]{1,0:T(8,128)}', space=vmem, size = 0x2000, scoped, tag = 'scratch operand']
  %s0 = inlined_call_operand.hbm [shape: bf16[16,32], index: 0, kind: input, shape index: {}]
  %s1 = inlined_call_operand.hbm [shape: bf16[32,96], index: 1, kind: input, shape index: {}]
  %s2 = inlined_call_operand.hbm [shape: f32[1,96], index: 2, kind: input, shape index: {}]
  %s3 = inlined_call_operand.hbm [shape: bf16[16,96], index: 3, kind: output, shape index: {}]
  %s4 = sld [smem:[#allocation0]]
  $region42: #{tpu_custom_call.1} parent=0
    _
  %s6 = ssub.s32 1, %s4
  %s7 = scalar_select 0, %s6, %s4
  $region1: #{tpu_custom_call.1} parent=0
    #allocation3 [shape = 'u8[4096]{0}', space=vmem, size = 0x1000, scoped, tag = 'input window, operand 0, single buffered']
    #allocation4 [shape = 's32[1]{0}', space=sflag, size = 0x4, scoped, tag = 'scoped memory for tpu_custom_call.1']
    #allocation5 [shape = 's32[1]{0}', space=sflag, size = 0x4, scoped, tag = 'scoped memory for tpu_custom_call.1']
    #allocation6 [shape = 'u8[8192]{0}', space=vmem, size = 0x2000, scoped, tag = 'input window, operand 1, single buffered']
    #allocation7 [shape = 's32[1]{0}', space=sflag, size = 0x4, scoped, tag = 'scoped memory for tpu_custom_call.1']
    #allocation8 [shape = 'u8[512]{0}', space=vmem, size = 0x400, scoped, tag = 'input window, operand 2, single buffered']
    #allocation9 [shape = 'u8[4096]{0}', space=vmem, size = 0x1000, scoped, tag = 'output window, operand 0, single buffered']
    %8 = vsyncpa [#allocation4], 0
    %9 = vsyncpa [#allocation7], 0
    %10 = vsyncpa [#allocation5], 0
    // Predicated region
    $region2: #{tpu_custom_call.1} parent=1 // pred_check
      _
    $region3: #{tpu_custom_call.1} parent=1 // pred_check_branch
      %12 = sbr.rel (0) target = $region5
    $region4: #{tpu_custom_call.1} parent=1 // pred_region
      %s14 = ssub.s32 128, 128
      %15 = vsyncadd [#allocation4], %s14
      %s16 = sshll.u32 [#allocation3], 4
      %s17 = int_to_ptr.vmem [resolvable:$true] %s16
      %22 = dma.hbm_to_vmem [thread:$0]  %s0, 128, %s17, [#allocation4], 64, 64, 4
    $region5: #{tpu_custom_call.1} parent=1 // pred_fallthru
      _
    // Predicated region
    $region6: #{tpu_custom_call.1} parent=1 // pred_check
      _
    $region7: #{tpu_custom_call.1} parent=1 // pred_check_branch
      %24 = sbr.rel (0) target = $region9
    $region8: #{tpu_custom_call.1} parent=1 // pred_region
      %s26 = ssub.s32 256, 256
      %27 = vsyncadd [#allocation7], %s26
      %s28 = sshll.u32 [#allocation6], 4
      %s29 = int_to_ptr.vmem [resolvable:$true] %s28
      %34 = dma.hbm_to_vmem [thread:$0]  %s1, 256, %s29, [#allocation7], 64, 64, 4
    $region9: #{tpu_custom_call.1} parent=1 // pred_fallthru
      _
    // Predicated region
    $region10: #{tpu_custom_call.1} parent=1 // pred_check
      _
    $region11: #{tpu_custom_call.1} parent=1 // pred_check_branch
      %36 = sbr.rel (0) target = $region13
    $region12: #{tpu_custom_call.1} parent=1 // pred_region
      %s38 = ssub.s32 16, 16
      %39 = vsyncadd [#allocation7], %s38
      %s41 = sshll.u32 [#allocation8], 4
      %s42 = int_to_ptr.vmem [resolvable:$true] %s41
      %44 = dma.hbm_to_vmem [thread:$0]  %s2, 16, %s42, [#allocation7]
    $region13: #{tpu_custom_call.1} parent=1 // pred_fallthru
      _
    // Predicated region
    $region14: #{tpu_custom_call.1} parent=1 // pred_check
      _
    $region15: #{tpu_custom_call.1} parent=1 // pred_check_branch
      %46 = sbr.rel (0) target = $region17
    $region16: #{tpu_custom_call.1} parent=1 // pred_region
      %47 = dma.done [#allocation4], 128
    $region17: #{tpu_custom_call.1} parent=1 // pred_fallthru
      _
    // Predicated region
    $region18: #{tpu_custom_call.1} parent=1 // pred_check
      _
    $region19: #{tpu_custom_call.1} parent=1 // pred_check_branch
      %49 = sbr.rel (0) target = $region21
    $region20: #{tpu_custom_call.1} parent=1 // pred_region
      %50 = dma.done [#allocation7], 256
    $region21: #{tpu_custom_call.1} parent=1 // pred_fallthru
      _
    // Predicated region
    $region22: #{tpu_custom_call.1} parent=1 // pred_check
      _
    $region23: #{tpu_custom_call.1} parent=1 // pred_check_branch
      %52 = sbr.rel (0) target = $region25
    $region24: #{tpu_custom_call.1} parent=1 // pred_region
      %53 = dma.done [#allocation7], 16
    $region25: #{tpu_custom_call.1} parent=1 // pred_fallthru
      _
    %p55 = scmp.eq.s32.totalorder 0, 0
    // Predicated region
    $region26: #{tpu_custom_call.1} parent=1 // pred_check
      %p56 = pneg %p55
    $region27: #{tpu_custom_call.1} parent=1 // pred_check_branch
      %58 = sbr.rel (%p56) target = $region29
    $region28: #{tpu_custom_call.1} parent=1 // pred_region
      %vm59 = vcmask 785408
      %60 = vst.msk [vmem:[#allocation2] sm:$0xff] %vm59, 0.0
      %61 = vst.msk [vmem:[#allocation2 + $0x8] sm:$0xff] %vm59, 0.0
    $region29: #{tpu_custom_call.1} parent=1 // pred_fallthru
      _
    %v62 = vld [vmem:[#allocation2] sm:$0xff]
    %v63 = vld [vmem:[#allocation2 + $0x8] sm:$0xff]
    %v64 = vld [vmem:[#allocation3] sm:$0xf]
    %v65 = vld [vmem:[#allocation3 + $0x4] sm:$0xf]
    %v66 = vld [vmem:[#allocation6] sm:$0xf]
    %v67 = vld [vmem:[#allocation6 + $0x4] sm:$0xf]
    %v68 = vld [vmem:[#allocation6 + $0x8] sm:$0xf]
    %v69 = vld [vmem:[#allocation6 + $0xc] sm:$0xf]
    %v72 = vunpack.c.l.b16 %v64
    %v73 = vunpack.c.l.b16 %v65
    %v74 = vpack.c.b16 %v73, %v72
    %v79 = vunpack.c.l.b16 %v66
    %v80 = vunpack.c.l.b16 %v67
    %v81 = vunpack.c.l.b16 %v68
    %v82 = vunpack.c.l.b16 %v69
    %v83 = vpack.c.b16 %v80, %v79
    %v84 = vpack.c.b16 %v82, %v81
    %vm87 = vcmask 261120
    %v89 = vsel %vm87, %v74, 0
    %91 = vmatprep.subr.bf16.mxu0 0
    %92 = vmatpush1.bf16.msra.mxu0 %v83
    %93 = vmatprep.subr.bf16.mxu0 0
    %94 = vmatpush1.bf16.msra.mxu0 %v84
    %95 = vmatprep.subr.bf16.mxu0 0
    %96 = vmatpush1.bf16.msra.mxu0 0
    %97 = vmatprep.subr.bf16.mxu0 0
    %98 = vmatpush1.bf16.msra.mxu0 0
    %99 = vmatprep.subr.bf16.mxu0 0
    %100 = vmatpush1.bf16.msra.mxu0 0
    %101 = vmatprep.subr.bf16.mxu0 0
    %102 = vmatpush1.bf16.msra.mxu0 0
    %103 = vmatprep.subr.bf16.mxu0 0
    %104 = vmatpush1.bf16.msra.mxu0 0
    %105 = vmatprep.subr.bf16.mxu0 0
    %106 = vmatpush1.bf16.msra.mxu0 0
    %107 = vmatprep.subr.bf16.mxu0 0
    %108 = vmatpush1.bf16.msra.mxu0 0
    %109 = vmatprep.subr.bf16.mxu0 0
    %110 = vmatpush1.bf16.msra.mxu0 0
    %111 = vmatprep.subr.bf16.mxu0 0
    %112 = vmatpush1.bf16.msra.mxu0 0
    %113 = vmatprep.subr.bf16.mxu0 0
    %114 = vmatpush1.bf16.msra.mxu0 0
    %115 = vmatprep.subr.bf16.mxu0 0
    %116 = vmatpush1.bf16.msra.mxu0 0
    %117 = vmatprep.subr.bf16.mxu0 0
    %118 = vmatpush1.bf16.msra.mxu0 0
    %119 = vmatprep.subr.bf16.mxu0 0
    %120 = vmatpush1.bf16.msra.mxu0 0
    %121 = vmatprep.subr.bf16.mxu0 0
    %122 = vmatpush1.bf16.msra.mxu0 0
    %123 = vmatprep.mubr.bf16.mxu0 0
    %124 = vmatmul.mubr.bf16.gmra.mrb[0].mxu0 %v89
    %v125 = vpop.f32.mrb[0].mxu0
    %v126 = vadd.f32 0.0, %v125
    %v127 = vpop.f32.mrb[0].mxu0
    %v128 = vpop.f32.mrb[0].mxu0
    %v129 = vadd.f32 0.0, %v128
    %v130 = vpop.f32.mrb[0].mxu0
    %131 = vdwg.mxu0
    %v132 = vadd.f32 %v62, %v126
    %v133 = vadd.f32 %v63, %v129
    %vm134 = vcmask 785408
    %135 = vst.msk [vmem:[#allocation2] sm:$0xff] %vm134, %v132
    %136 = vst.msk [vmem:[#allocation2 + $0x8] sm:$0xff] %vm134, %v133
    // Predicated region
    $region30: #{tpu_custom_call.1} parent=1 // pred_check
      %p137 = pneg %p55
    $region31: #{tpu_custom_call.1} parent=1 // pred_check_branch
      %139 = sbr.rel (%p137) target = $region33
    $region32: #{tpu_custom_call.1} parent=1 // pred_region
      %v140 = vld [vmem:[#allocation2] sm:$0xff]
      %v141 = vld [vmem:[#allocation2 + $0x8] sm:$0xff]
      %v142 = vld [vmem:[#allocation8] sm:$0x1]
      %v144 = vlaneseq
      %v145 = vshrl.u32 %v144, 7
      %v146 = vsub.s32 0, %v145
      %v147 = vrot.slane %v142, %v146
      %v149 = vadd.f32 %v140, %v147
      %v150 = vadd.f32 %v141, %v147
      %v151 = vpack.c.bf16 %v150, %v149
      %v153 = vunpack.c.l.b16 %v151
      %v154 = vunpack.c.h.b16 %v151
      %v155 = vpack.c.b16 %v153, %v153
      %v156 = vpack.c.b16 %v154, %v154
      %vm159 = vcmask 781312
      %160 = vst.msk [vmem:[#allocation9] sm:$0xf] %vm159, %v155
      %161 = vst.msk [vmem:[#allocation9 + $0x4] sm:$0xf] %vm159, %v156
    $region33: #{tpu_custom_call.1} parent=1 // pred_fallthru
      _
    // Predicated region
    $region34: #{tpu_custom_call.1} parent=1 // pred_check
      _
    $region35: #{tpu_custom_call.1} parent=1 // pred_check_branch
      %163 = sbr.rel (0) target = $region37
    $region36: #{tpu_custom_call.1} parent=1 // pred_region
      %s165 = ssub.s32 128, 128
      %166 = vsyncadd [#allocation5], %s165
      %s167 = sshll.u32 [#allocation9], 4
      %s168 = int_to_ptr.vmem [resolvable:$true] %s167
      %173 = dma.vmem_to_hbm [thread:$0]  %s168, 128, %s3, [#allocation5], 64, 64, 4
    $region37: #{tpu_custom_call.1} parent=1 // pred_fallthru
      _
    // Predicated region
    $region38: #{tpu_custom_call.1} parent=1 // pred_check
      _
    $region39: #{tpu_custom_call.1} parent=1 // pred_check_branch
      %175 = sbr.rel (0) target = $region41
    $region40: #{tpu_custom_call.1} parent=1 // pred_region
      %176 = dma.done [#allocation5], 128
    $region41: #{tpu_custom_call.1} parent=1 // pred_fallthru
      _
    %177 = vsyncpa [#allocation4], 1
    %178 = vsyncpa [#allocation7], 1
    %179 = vsyncpa [#allocation5], 1

</llo_original>
